<compile_context>
chip_gen: v7x
topology: tpu7x:2x2x1
jax: 0.10.0
libtpu: 0.0.40
codegen_flags: <defaults>
</compile_context>

<pallas_src>
import functools
import math

import jax
import jax.numpy as jnp
from jax.experimental import pallas as pl
from jax.experimental.pallas import tpu as pltpu

_LANE = 128
_SUBLANE = 8


# ----------------------------- kernels --------------------------------------

def _pe_add_kernel(x_ref, pe_ref, o_ref):
    # x_ref: (TR, TC), pe_ref: (1, TC) -> broadcast add over the row axis.
    o_ref[...] = (x_ref[...] + pe_ref[...]).astype(o_ref.dtype)


def _pe_add_dropout_kernel(x_ref, pe_ref, u_ref, o_ref, *, p):
    # Inverted dropout: keep with prob (1-p), scale kept values by 1/(1-p).
    y = x_ref[...] + pe_ref[...]
    keep = u_ref[...] >= jnp.float32(p)
    scale = jnp.float32(1.0 / (1.0 - p))
    o_ref[...] = jnp.where(keep, y * scale, jnp.zeros_like(y)).astype(o_ref.dtype)


# ----------------------------- helpers ---------------------------------------

def make_positional_encoding_table(d_model, max_len=5000, dtype=jnp.float32):
    """Equivalent of the `pe` buffer built in PositionalEncoding.__init__."""
    position = jnp.arange(0, max_len, dtype=jnp.float32)[:, None]          # (L, 1)
    div_term = jnp.exp(
        jnp.arange(0, d_model, 2, dtype=jnp.float32)
        * -(math.log(10000.0) / d_model))                                   # (ceil(D/2),)
    ang = position * div_term                                               # (L, ceil(D/2))
    pe = jnp.zeros((max_len, d_model), dtype=jnp.float32)
    pe = pe.at[:, 0::2].set(jnp.sin(ang))
    # slice cos columns so odd d_model also works (latent bug in the original)
    pe = pe.at[:, 1::2].set(jnp.cos(ang)[:, : d_model // 2])
    return pe.astype(dtype)


def _pick_block(n_rows, n_cols, itemsize, block_bytes=4 * 1024 * 1024):
    """Pick (rows, cols) block for a (n_rows, n_cols) array, ~block_bytes big.

    Each dim is either a multiple of the hardware tile (8, 128) or the full
    array extent, as required by Pallas TPU BlockSpecs.
    """
    max_elems = max(block_bytes // itemsize, _SUBLANE * _LANE)
    row_unit = n_rows if n_rows < _SUBLANE else _SUBLANE
    if row_unit * n_cols <= max_elems:
        tc = n_cols                                   # take full rows
    else:
        tc = max(_LANE, (max_elems // row_unit) // _LANE * _LANE)
    units = max(1, max_elems // (row_unit * tc))
    tr = min(n_rows, units * row_unit)
    return tr, tc


# ----------------------------- wrapper ---------------------------------------

def positional_encoding_forward(x, pe, *, p=0.1, training=False, rng_key=None):
    """x: [B, S, D].  pe: [max_len, D].  Returns [B, S, D]."""
    B, S, D = x.shape
    SD = S * D

    # Lane-dense flattened views (PE broadcast is over batch only, so the add
    # pattern is preserved).  x reshape is a free bitcast; the pe[:S] reshape
    # is a small S*D copy outside the kernel (negligible vs 3*B*S*D traffic).
    x2 = x.reshape(B, SD)
    pe2 = pe[:S].reshape(1, SD)

    itemsize = jnp.dtype(x.dtype).itemsize
    tr, tc = _pick_block(B, SD, itemsize)
    grid = (pl.cdiv(SD, tc), pl.cdiv(B, tr))          # cols outer, rows inner

    x_spec = pl.BlockSpec((tr, tc), lambda j, i: (i, j))
    pe_spec = pl.BlockSpec((1, tc), lambda j, i: (0, j))   # re-used across inner steps
    out_spec = pl.BlockSpec((tr, tc), lambda j, i: (i, j))

    cparams = pltpu.CompilerParams(
        dimension_semantics=("parallel", "parallel"))

    if (not training) or p == 0.0:
        cost = pl.CostEstimate(
            flops=B * SD, transcendentals=0,
            bytes_accessed=(2 * B + 1) * SD * itemsize)
        out2 = pl.pallas_call(
            _pe_add_kernel,
            out_shape=jax.ShapeDtypeStruct((B, SD), x.dtype),
            grid=grid,
            in_specs=[x_spec, pe_spec],
            out_specs=out_spec,
            compiler_params=cparams,
            cost_estimate=cost,
        )(x2, pe2)
        return out2.reshape(B, S, D)

    if rng_key is None:
        rng_key = jax.random.PRNGKey(0)
    # TODO(synk): dropout mask is drawn with jax.random outside the kernel
    # (costs one extra B*S*D*4 B HBM read); pltpu.prng_random_bits would avoid
    # it but has no CPU/interpret lowering, and its stream differs from
    # torch.nn.Dropout's RNG anyway.
    u2 = jax.random.uniform(rng_key, (B, SD), dtype=jnp.float32)

    cost = pl.CostEstimate(
        flops=3 * B * SD, transcendentals=0,
        bytes_accessed=(3 * B + 1) * SD * itemsize)
    out2 = pl.pallas_call(
        functools.partial(_pe_add_dropout_kernel, p=float(p)),
        out_shape=jax.ShapeDtypeStruct((B, SD), x.dtype),
        grid=grid,
        in_specs=[x_spec, pe_spec, pl.BlockSpec((tr, tc), lambda j, i: (i, j))],
        out_specs=out_spec,
        compiler_params=cparams,
        cost_estimate=cost,
    )(x2, pe2, u2)
    return out2.reshape(B, S, D)


# ----------------------------- main -------------------------------------------

if __name__ == "__main__":
    d_model = 32
    max_len = 64
    B, S = 2, 8
    p_dropout = 0.1

    key = jax.random.PRNGKey(0)
    x = jax.random.normal(key, (B, S, d_model), dtype=jnp.float32)

    pe = make_positional_encoding_table(d_model, max_len)

    # eval-mode forward (dropout identity) — matches PyTorch module in .eval()
    out = positional_encoding_forward(x, pe, p=p_dropout, training=False)
    out = jax.block_until_ready(out)

    ref = x + pe[:S][None, :, :]
    assert out.shape == (B, S, d_model)
    assert jnp.allclose(out, ref, atol=1e-6), "mismatch vs reference (eval path)"

    # training-mode forward: every output is either 0 (dropped) or scaled ref
    out_tr = positional_encoding_forward(
        x, pe, p=p_dropout, training=True, rng_key=jax.random.PRNGKey(123))
    out_tr = jax.block_until_ready(out_tr)
    scaled = ref / (1.0 - p_dropout)
    ok = jnp.where(out_tr == 0, True,
                   jnp.isclose(out_tr, scaled, rtol=1e-5, atol=1e-5))
    assert out_tr.shape == (B, S, d_model)
    assert bool(jnp.all(ok)), "mismatch vs reference (dropout path)"

    print("KERNEL_OK")
</pallas_src>

<mosaic_0001>
module attributes {stable_mosaic.version = 11 : i64} {
  func.func @_pe_add_kernel(%arg0: i32, %arg1: i32, %arg2: memref<2x256xf32, #tpu.memory_space<vmem>>, %arg3: memref<1x256xf32, #tpu.memory_space<vmem>>, %arg4: memref<2x256xf32, #tpu.memory_space<vmem>>) attributes {dimension_semantics = [#tpu.dimension_semantics<parallel>, #tpu.dimension_semantics<parallel>], iteration_bounds = array<i64: 1, 1>, scalar_prefetch = 0 : i64, scratch_operands = 0 : i64, tpu.core_type = #tpu.core_type<tc>, window_params = [{transform_indices = @transform_0, window_bounds = array<i64: 2, 256>}, {transform_indices = @transform_1, window_bounds = array<i64: 1, 256>}, {transform_indices = @transform_2, window_bounds = array<i64: 2, 256>}]} {
    %c0 = arith.constant 0 : index
    %c0_0 = arith.constant 0 : index
    %0 = vector.load %arg2[%c0, %c0_0] : memref<2x256xf32, #tpu.memory_space<vmem>>, vector<2x256xf32>
    %c0_1 = arith.constant 0 : index
    %c0_2 = arith.constant 0 : index
    %1 = vector.load %arg3[%c0_1, %c0_2] : memref<1x256xf32, #tpu.memory_space<vmem>>, vector<1x256xf32>
    %2 = vector.broadcast %1 : vector<1x256xf32> to vector<2x256xf32>
    %3 = arith.addf %0, %2 : vector<2x256xf32>
    %c0_3 = arith.constant 0 : index
    %c0_4 = arith.constant 0 : index
    %4 = vector.load %arg4[%c0_3, %c0_4] : memref<2x256xf32, #tpu.memory_space<vmem>>, vector<2x256xf32>
    tpu.vector_store %arg4[%c0_3, %c0_4], %3 {strides = array<i32>} : memref<2x256xf32, #tpu.memory_space<vmem>>, vector<2x256xf32>,
    return
  }
  func.func @transform_0(%arg0: i32, %arg1: i32) -> (i32, i32) {
    %c0_i32 = arith.constant 0 : i32
    return %arg1, %arg0 : i32, i32
  }
  func.func @transform_1(%arg0: i32, %arg1: i32) -> (i32, i32) {
    %c0_i32 = arith.constant 0 : i32
    %c0_i32_0 = arith.constant 0 : i32
    return %c0_i32, %arg0 : i32, i32
  }
  func.func @transform_2(%arg0: i32, %arg1: i32) -> (i32, i32) {
    %c0_i32 = arith.constant 0 : i32
    return %arg1, %arg0 : i32, i32
  }
}

</mosaic_0001>

<llo_original>
// kernel: tpu_custom_call.1
$region0: #{tpu_custom_call.1}
  #allocation0 [shape = 'u32[]', space=smem, size = 0x4, offset = 0x4, fixed_abs, tag = 'smem constant byte address 0x4 - core index']
  #allocation1 [shape = 'u32[144,128]{1,0:T(1,128)}', space=vmem, size = 0x12000, scoped, tag = 'internal scratch']
  %s0 = inlined_call_operand.hbm [shape: f32[2,256], index: 0, kind: input, shape index: {}]
  %s1 = inlined_call_operand.vmem [shape: f32[1,256], index: 1, kind: input, shape index: {}]
  %s2 = inlined_call_operand.hbm [shape: f32[2,256], index: 2, kind: output, shape index: {}]
  %s3 = sld [smem:[#allocation0]]
  $region22: #{tpu_custom_call.1} parent=0
    _
  %s5 = ssub.s32 1, %s3
  %s6 = scalar_select 0, %s5, %s3
  $region1: #{tpu_custom_call.1} parent=0
    #allocation2 [shape = 'u8[2048]{0}', space=vmem, size = 0x800, scoped, tag = 'input window, operand 0, single buffered']
    #allocation3 [shape = 's32[1]{0}', space=sflag, size = 0x4, scoped, tag = 'scoped memory for tpu_custom_call.1']
    #allocation4 [shape = 's32[1]{0}', space=sflag, size = 0x4, scoped, tag = 'scoped memory for tpu_custom_call.1']
    #allocation5 [shape = 'u8[2048]{0}', space=vmem, size = 0x800, scoped, tag = 'output window, operand 0, single buffered']
    %7 = vsyncpa [#allocation3], 0
    %8 = vsyncpa [#allocation4], 0
    // Predicated region
    $region2: #{tpu_custom_call.1} parent=1 // pred_check
      _
    $region3: #{tpu_custom_call.1} parent=1 // pred_check_branch
      %10 = sbr.rel (0) target = $region5
    $region4: #{tpu_custom_call.1} parent=1 // pred_region
      %s12 = ssub.s32 64, 64
      %13 = vsyncadd [#allocation3], %s12
      %s15 = sshll.u32 [#allocation2], 4
      %s16 = int_to_ptr.vmem [resolvable:$true] %s15
      %18 = dma.hbm_to_vmem [thread:$0]  %s0, 64, %s16, [#allocation3]
    $region5: #{tpu_custom_call.1} parent=1 // pred_fallthru
      _
    // Predicated region
    $region6: #{tpu_custom_call.1} parent=1 // pred_check
      _
    $region7: #{tpu_custom_call.1} parent=1 // pred_check_branch
      %20 = sbr.rel (0) target = $region9
    $region8: #{tpu_custom_call.1} parent=1 // pred_region
      _
    $region9: #{tpu_custom_call.1} parent=1 // pred_fallthru
      _
    // Predicated region
    $region10: #{tpu_custom_call.1} parent=1 // pred_check
      _
    $region11: #{tpu_custom_call.1} parent=1 // pred_check_branch
      %22 = sbr.rel (0) target = $region13
    $region12: #{tpu_custom_call.1} parent=1 // pred_region
      %23 = dma.done [#allocation3], 64
    $region13: #{tpu_custom_call.1} parent=1 // pred_fallthru
      _
    %v24 = vld [vmem:[#allocation2] sm:$0xf]
    %v25 = vld [vmem:[%s1] sm:$0x3]
    %v27 = vlaneseq
    %v28 = vshrl.u32 %v27, 7
    %v29 = vsub.s32 0, %v28
    %v30 = vrot.slane %v25, %v29
    %v31 = vlaneseq
    %v32 = vshrl.u32 %v31, 7
    %v33 = vsub.s32 1, %v32
    %v34 = vrot.slane %v25, %v33
    %v35 = vcombine.low %v30, %v34
    %v37 = vunpack.c.l.s4 1983009808
    %v38 = vunpack.c.0.s8 %v37
    %v39 = vlaneseq
    %v40 = vshrl.u32 %v39, 7
    %v41 = vsub.s32 %v38, %v40
    %v42 = vrot.slane %v35, %v41
    %v44 = vadd.f32 %v24, %v42
    %45 = vst [vmem:[#allocation5] sm:$0xf] %v44
    // Predicated region
    $region14: #{tpu_custom_call.1} parent=1 // pred_check
      _
    $region15: #{tpu_custom_call.1} parent=1 // pred_check_branch
      %47 = sbr.rel (0) target = $region17
    $region16: #{tpu_custom_call.1} parent=1 // pred_region
      %s49 = ssub.s32 64, 64
      %50 = vsyncadd [#allocation4], %s49
      %s52 = sshll.u32 [#allocation5], 4
      %s53 = int_to_ptr.vmem [resolvable:$true] %s52
      %55 = dma.vmem_to_hbm [thread:$0]  %s53, 64, %s2, [#allocation4]
    $region17: #{tpu_custom_call.1} parent=1 // pred_fallthru
      _
    // Predicated region
    $region18: #{tpu_custom_call.1} parent=1 // pred_check
      _
    $region19: #{tpu_custom_call.1} parent=1 // pred_check_branch
      %57 = sbr.rel (0) target = $region21
    $region20: #{tpu_custom_call.1} parent=1 // pred_region
      %58 = dma.done [#allocation4], 64
    $region21: #{tpu_custom_call.1} parent=1 // pred_fallthru
      _
    %59 = vsyncpa [#allocation3], 1
    %60 = vsyncpa [#allocation4], 1

</llo_original>
